<compile_context>
chip_gen: v5e
topology: v5e:2x2
jax: 0.10.0
libtpu: 0.0.40
codegen_flags: <defaults>
</compile_context>

<pallas_src>
import functools

import jax
import jax.numpy as jnp
from jax.experimental import pallas as pl
from jax.experimental.pallas import tpu as pltpu


HIDDEN = 128  # fixed by the PyTorch module


def _round_up(x, m):
    return ((x + m - 1) // m) * m


def _is_v5e():
    """Detect a 128x128-MXU chip (v5e); fall back to the fused path otherwise."""
    try:
        kind = jax.devices()[0].device_kind.lower()
        return ("v5 lite" in kind) or ("v5e" in kind) or ("v5lite" in kind)
    except Exception:
        return False


# --------------------------------------------------------------------------
# Kernel: fused 3-layer MLP (both heads) for one batch tile.
# --------------------------------------------------------------------------
def ppo_kernel(x_ref, w1_ref, w2_ref, w3_ref, b_ref, out_ref, *, split_layer2):
    wdt = w1_ref.dtype                 # MXU input dtype (bf16 by default)
    h2 = w2_ref.shape[0]               # fused hidden width (2 * HIDDEN)
    ow = out_ref.shape[-1]             # lane-dense output width (multiple of 128)

    x = x_ref[...]
    b = b_ref[...]                     # f32 biases, rows 0/1/2 used

    # Layer 1 (both heads side-by-side): [TB, S] @ [S, 2H]
    h = jnp.dot(x.astype(wdt), w1_ref[...], preferred_element_type=jnp.float32)
    # Bias + ReLU tail stays f32 (v5e VPU has no bf16 ALU path).
    h = jnp.maximum(h + b[0:1, :h2], 0.0)

    # Layer 2 (block-diagonal): [TB, 2H] @ [2H, 2H]
    if split_layer2:
        # v5e (128^2 MXU): two 128-wide dots skip the zero off-diagonal blocks.
        hp = jnp.dot(h[:, :HIDDEN].astype(wdt), w2_ref[:HIDDEN, :HIDDEN],
                     preferred_element_type=jnp.float32)
        hv = jnp.dot(h[:, HIDDEN:].astype(wdt), w2_ref[HIDDEN:, HIDDEN:],
                     preferred_element_type=jnp.float32)
        h = jnp.concatenate([hp, hv], axis=-1)
    else:
        # v6e/v7x (256^2 MXU): one full-width pass is fastest.
        h = jnp.dot(h.astype(wdt), w2_ref[...], preferred_element_type=jnp.float32)
    h = jnp.maximum(h + b[1:2, :h2], 0.0)

    # Layer 3 (block-diagonal, lane-dense output): [TB, 2H] @ [2H, OW]
    y = jnp.dot(h.astype(wdt), w3_ref[...], preferred_element_type=jnp.float32)
    out_ref[...] = (y + b[2:3, :ow]).astype(out_ref.dtype)


# --------------------------------------------------------------------------
# Wrapper: pack params, tile the batch, call the kernel, split the output.
# --------------------------------------------------------------------------
def _pack_fused_params(params, param_dtype):
    """Build fused/block-diagonal weights and a single bias block (f32)."""
    hidden = params["pw1"].shape[1]
    action_dim = params["pw3"].shape[1]
    h2 = 2 * hidden
    out_w = _round_up(action_dim + 1, 128)         # lane-dense output width
    bias_w = max(h2, out_w)

    f32 = jnp.float32
    # Layer 1: [S, 2H] = [pw1 | vw1]
    w1 = jnp.concatenate([params["pw1"], params["vw1"]], axis=1).astype(f32)
    # Layer 2: block-diag([pw2, vw2])  -> [2H, 2H]
    w2 = jnp.zeros((h2, h2), f32)
    w2 = w2.at[:hidden, :hidden].set(params["pw2"])
    w2 = w2.at[hidden:, hidden:].set(params["vw2"])
    # Layer 3: block-diag into lane-dense output  -> [2H, out_w]
    w3 = jnp.zeros((h2, out_w), f32)
    w3 = w3.at[:hidden, :action_dim].set(params["pw3"])
    w3 = w3.at[hidden:, action_dim:action_dim + 1].set(params["vw3"])
    # Biases: one [8, bias_w] f32 block (rows 0/1/2 used, padded to 8 sublanes)
    b = jnp.zeros((8, bias_w), f32)
    b = b.at[0, :h2].set(jnp.concatenate([params["pb1"], params["vb1"]], axis=1)[0])
    b = b.at[1, :h2].set(jnp.concatenate([params["pb2"], params["vb2"]], axis=1)[0])
    b = b.at[2, :action_dim].set(params["pb3"][0])
    b = b.at[2, action_dim].set(params["vb3"][0, 0])

    return (w1.astype(param_dtype), w2.astype(param_dtype),
            w3.astype(param_dtype), b, action_dim, out_w)


def _pick_batch_tile(B):
    """Large tiles to amortize the ~0.35us/step overhead; >=2 steps when B>=1024
    so the 'parallel' batch axis can shard across megacore TensorCores."""
    if B < 1024:
        return _round_up(max(B, 1), 8)                 # single tile for small B
    return min(2048, _round_up(pl.cdiv(B, 2), 8))      # >= 2 grid steps


def ppo_forward(state, params, param_dtype=jnp.bfloat16, out_dtype=jnp.float32,
                split_layer2=None):
    """state: [B, state_dim] f32 -> (policy [B, action_dim], value [B, 1]).

    param_dtype: MXU input dtype for the weights/activations (bf16 default,
                 f32 escape hatch). Accumulation is always f32.
    out_dtype:   dtype of the fused output slab written to HBM.
    """
    B, S = state.shape
    if split_layer2 is None:
        split_layer2 = _is_v5e()

    w1, w2, w3, b, action_dim, out_w = _pack_fused_params(params, param_dtype)
    h2 = w2.shape[0]

    TB = _pick_batch_tile(B)
    grid = (pl.cdiv(B, TB),)   # ragged tail handled by masked OOB block writes

    out = pl.pallas_call(
        functools.partial(ppo_kernel, split_layer2=split_layer2),
        out_shape=jax.ShapeDtypeStruct((B, out_w), out_dtype),
        grid=grid,
        in_specs=[
            pl.BlockSpec((TB, S), lambda i: (i, 0)),          # state (pipelined)
            pl.BlockSpec((S, h2), lambda i: (0, 0)),          # fused w1 (resident)
            pl.BlockSpec((h2, h2), lambda i: (0, 0)),         # fused w2 (resident)
            pl.BlockSpec((h2, out_w), lambda i: (0, 0)),      # fused w3 (resident)
            pl.BlockSpec((8, b.shape[1]), lambda i: (0, 0)),  # fused biases
        ],
        out_specs=pl.BlockSpec((TB, out_w), lambda i: (i, 0)),
        compiler_params=pltpu.CompilerParams(
            dimension_semantics=("parallel",),          # megacore on v7x
            vmem_limit_bytes=32 * 1024 * 1024,          # < v7x's 64 MiB VMEM
        ),
    )(state, w1, w2, w3, b)

    # TODO(synk): for very large rollout batches, hand the fused [B, 128] slab
    # to the consumer and slice lanes there to avoid this extra HBM pass.
    policy = out[:, :action_dim]
    value = out[:, action_dim:action_dim + 1]
    return policy, value


# --------------------------------------------------------------------------
# Params (PyTorch nn.Linear-style init; weights stored [in, out], biases [1, out]).
# --------------------------------------------------------------------------
def init_params(key, state_dim, action_dim, hidden=HIDDEN):
    ks = jax.random.split(key, 12)

    def w(k, fan_in, fan_out):
        bound = 1.0 / jnp.sqrt(fan_in)
        return jax.random.uniform(k, (fan_in, fan_out), jnp.float32,
                                  minval=-bound, maxval=bound)

    def bi(k, fan_in, fan_out):
        bound = 1.0 / jnp.sqrt(fan_in)
        return jax.random.uniform(k, (1, fan_out), jnp.float32,
                                  minval=-bound, maxval=bound)

    return {
        "pw1": w(ks[0], state_dim, hidden), "pb1": bi(ks[1], state_dim, hidden),
        "pw2": w(ks[2], hidden, hidden),    "pb2": bi(ks[3], hidden, hidden),
        "pw3": w(ks[4], hidden, action_dim),"pb3": bi(ks[5], hidden, action_dim),
        "vw1": w(ks[6], state_dim, hidden), "vb1": bi(ks[7], state_dim, hidden),
        "vw2": w(ks[8], hidden, hidden),    "vb2": bi(ks[9], hidden, hidden),
        "vw3": w(ks[10], hidden, 1),        "vb3": bi(ks[11], hidden, 1),
    }


def ppo_forward_ref(state, params):
    """Pure-JAX reference (unfused heads) for correctness checking."""
    def mlp(x, w1, b1, w2, b2, w3, b3):
        h = jnp.maximum(x @ w1 + b1, 0.0)
        h = jnp.maximum(h @ w2 + b2, 0.0)
        return h @ w3 + b3

    policy = mlp(state, params["pw1"], params["pb1"], params["pw2"],
                 params["pb2"], params["pw3"], params["pb3"])
    value = mlp(state, params["vw1"], params["vb1"], params["vw2"],
                params["vb2"], params["vw3"], params["vb3"])
    return policy, value


if __name__ == "__main__":
    key = jax.random.PRNGKey(0)
    k_state, k_params = jax.random.split(key)

    B, STATE_DIM, ACTION_DIM = 8, 32, 8
    state = jax.random.normal(k_state, (B, STATE_DIM), jnp.float32)
    params = init_params(k_params, STATE_DIM, ACTION_DIM)

    policy_ref, value_ref = ppo_forward_ref(state, params)

    # Default path: bf16 weights into the MXU, f32 accumulation, f32 output.
    fwd = jax.jit(ppo_forward)
    policy, value = fwd(state, params)
    jax.block_until_ready((policy, value))
    assert policy.shape == (B, ACTION_DIM) and value.shape == (B, 1)
    assert jnp.allclose(policy, policy_ref, atol=2e-2, rtol=2e-2)
    assert jnp.allclose(value, value_ref, atol=2e-2, rtol=2e-2)

    # f32 escape hatch: bit-tight vs reference.
    fwd_f32 = jax.jit(functools.partial(ppo_forward, param_dtype=jnp.float32))
    p32, v32 = fwd_f32(state, params)
    jax.block_until_ready((p32, v32))
    assert jnp.allclose(p32, policy_ref, atol=1e-5, rtol=1e-5)
    assert jnp.allclose(v32, value_ref, atol=1e-5, rtol=1e-5)

    # bf16 output slab option (halves the dominant HBM write stream).
    fwd_o16 = jax.jit(functools.partial(ppo_forward, out_dtype=jnp.bfloat16))
    p16, v16 = fwd_o16(state, params)
    jax.block_until_ready((p16, v16))
    assert p16.dtype == jnp.bfloat16 and v16.dtype == jnp.bfloat16
    assert jnp.allclose(p16.astype(jnp.float32), policy_ref, atol=5e-2, rtol=5e-2)
    assert jnp.allclose(v16.astype(jnp.float32), value_ref, atol=5e-2, rtol=5e-2)

    # Also exercise the v5e split-layer-2 code path explicitly for correctness.
    fwd_split = jax.jit(functools.partial(ppo_forward, param_dtype=jnp.float32,
                                          split_layer2=True))
    ps, vs = fwd_split(state, params)
    jax.block_until_ready((ps, vs))
    assert jnp.allclose(ps, policy_ref, atol=1e-5, rtol=1e-5)
    assert jnp.allclose(vs, value_ref, atol=1e-5, rtol=1e-5)

    print("KERNEL_OK")
</pallas_src>

<mosaic_0001>
module attributes {stable_mosaic.version = 11 : i64} {
  func.func @ppo_kernel(%arg0: i32, %arg1: memref<8x32xf32, #tpu.memory_space<vmem>>, %arg2: memref<32x256xbf16, #tpu.memory_space<vmem>>, %arg3: memref<256x256xbf16, #tpu.memory_space<vmem>>, %arg4: memref<256x128xbf16, #tpu.memory_space<vmem>>, %arg5: memref<8x256xf32, #tpu.memory_space<vmem>>, %arg6: memref<8x128xf32, #tpu.memory_space<vmem>>) attributes {dimension_semantics = [#tpu.dimension_semantics<parallel>], iteration_bounds = array<i64: 1>, scalar_prefetch = 0 : i64, scratch_operands = 0 : i64, tpu.core_type = #tpu.core_type<tc>, window_params = [{transform_indices = @transform_0, window_bounds = array<i64: 8, 32>}, {pipeline_mode = #tpu.pipeline_mode<synchronous>, transform_indices = @transform_1, window_bounds = array<i64: 32, 256>}, {pipeline_mode = #tpu.pipeline_mode<synchronous>, transform_indices = @transform_2, window_bounds = array<i64: 256, 256>}, {pipeline_mode = #tpu.pipeline_mode<synchronous>, transform_indices = @transform_3, window_bounds = array<i64: 256, 128>}, {pipeline_mode = #tpu.pipeline_mode<synchronous>, transform_indices = @transform_4, window_bounds = array<i64: 8, 256>}, {transform_indices = @transform_5, window_bounds = array<i64: 8, 128>}]} {
    %c0 = arith.constant 0 : index
    %c0_0 = arith.constant 0 : index
    %0 = vector.load %arg1[%c0, %c0_0] : memref<8x32xf32, #tpu.memory_space<vmem>>, vector<8x32xf32>
    %c0_1 = arith.constant 0 : index
    %c0_2 = arith.constant 0 : index
    %1 = vector.load %arg5[%c0_1, %c0_2] : memref<8x256xf32, #tpu.memory_space<vmem>>, vector<8x256xf32>
    %2 = arith.truncf %0 : vector<8x32xf32> to vector<8x32xbf16>
    %c0_3 = arith.constant 0 : index
    %c0_4 = arith.constant 0 : index
    %3 = vector.load %arg2[%c0_3, %c0_4] : memref<32x256xbf16, #tpu.memory_space<vmem>>, vector<32x256xbf16>
    %cst = arith.constant dense<0.000000e+00> : vector<8x256xf32>
    %4 = tpu.matmul %2, %3, %cst {dimension_numbers = #tpu.dot_dimension_numbers<[1], [0], [0], [1], [0, 0, 1, 1], [], []>} : vector<8x32xbf16>, vector<32x256xbf16>, vector<8x256xf32> -> vector<8x256xf32>
    %5 = vector.extract_strided_slice %1 {offsets = [0, 0], sizes = [1, 256], strides = [1, 1]} : vector<8x256xf32> to vector<1x256xf32>
    %6 = vector.broadcast %5 : vector<1x256xf32> to vector<8x256xf32>
    %7 = arith.addf %4, %6 : vector<8x256xf32>
    %cst_5 = arith.constant 0.000000e+00 : f32
    %8 = vector.broadcast %cst_5 : f32 to vector<8x256xf32>
    %9 = arith.maximumf %7, %8 : vector<8x256xf32>
    %10 = arith.truncf %9 : vector<8x256xf32> to vector<8x256xbf16>
    %c0_6 = arith.constant 0 : index
    %c0_7 = arith.constant 0 : index
    %11 = vector.load %arg3[%c0_6, %c0_7] : memref<256x256xbf16, #tpu.memory_space<vmem>>, vector<256x256xbf16>
    %cst_8 = arith.constant dense<0.000000e+00> : vector<8x256xf32>
    %12 = tpu.matmul %10, %11, %cst_8 {dimension_numbers = #tpu.dot_dimension_numbers<[1], [0], [0], [1], [0, 0, 1, 1], [], []>} : vector<8x256xbf16>, vector<256x256xbf16>, vector<8x256xf32> -> vector<8x256xf32>
    %13 = vector.extract_strided_slice %1 {offsets = [1, 0], sizes = [1, 256], strides = [1, 1]} : vector<8x256xf32> to vector<1x256xf32>
    %14 = vector.broadcast %13 : vector<1x256xf32> to vector<8x256xf32>
    %15 = arith.addf %12, %14 : vector<8x256xf32>
    %cst_9 = arith.constant 0.000000e+00 : f32
    %16 = vector.broadcast %cst_9 : f32 to vector<8x256xf32>
    %17 = arith.maximumf %15, %16 : vector<8x256xf32>
    %18 = arith.truncf %17 : vector<8x256xf32> to vector<8x256xbf16>
    %c0_10 = arith.constant 0 : index
    %c0_11 = arith.constant 0 : index
    %19 = vector.load %arg4[%c0_10, %c0_11] : memref<256x128xbf16, #tpu.memory_space<vmem>>, vector<256x128xbf16>
    %cst_12 = arith.constant dense<0.000000e+00> : vector<8x128xf32>
    %20 = tpu.matmul %18, %19, %cst_12 {dimension_numbers = #tpu.dot_dimension_numbers<[1], [0], [0], [1], [0, 0, 1, 1], [], []>} : vector<8x256xbf16>, vector<256x128xbf16>, vector<8x128xf32> -> vector<8x128xf32>
    %21 = vector.extract_strided_slice %1 {offsets = [2, 0], sizes = [1, 128], strides = [1, 1]} : vector<8x256xf32> to vector<1x128xf32>
    %22 = vector.broadcast %21 : vector<1x128xf32> to vector<8x128xf32>
    %23 = arith.addf %20, %22 : vector<8x128xf32>
    %c0_13 = arith.constant 0 : index
    %c0_14 = arith.constant 0 : index
    %24 = vector.load %arg6[%c0_13, %c0_14] : memref<8x128xf32, #tpu.memory_space<vmem>>, vector<8x128xf32>
    tpu.vector_store %arg6[%c0_13, %c0_14], %23 {strides = array<i32>} : memref<8x128xf32, #tpu.memory_space<vmem>>, vector<8x128xf32>,
    return
  }
  func.func @transform_0(%arg0: i32) -> (i32, i32) {
    %c0_i32 = arith.constant 0 : i32
    %c0_i32_0 = arith.constant 0 : i32
    return %arg0, %c0_i32 : i32, i32
  }
  func.func @transform_1(%arg0: i32) -> (i32, i32) {
    %c0_i32 = arith.constant 0 : i32
    %c0_i32_0 = arith.constant 0 : i32
    %c0_i32_1 = arith.constant 0 : i32
    return %c0_i32, %c0_i32_0 : i32, i32
  }
  func.func @transform_2(%arg0: i32) -> (i32, i32) {
    %c0_i32 = arith.constant 0 : i32
    %c0_i32_0 = arith.constant 0 : i32
    %c0_i32_1 = arith.constant 0 : i32
    return %c0_i32, %c0_i32_0 : i32, i32
  }
  func.func @transform_3(%arg0: i32) -> (i32, i32) {
    %c0_i32 = arith.constant 0 : i32
    %c0_i32_0 = arith.constant 0 : i32
    %c0_i32_1 = arith.constant 0 : i32
    return %c0_i32, %c0_i32_0 : i32, i32
  }
  func.func @transform_4(%arg0: i32) -> (i32, i32) {
    %c0_i32 = arith.constant 0 : i32
    %c0_i32_0 = arith.constant 0 : i32
    %c0_i32_1 = arith.constant 0 : i32
    return %c0_i32, %c0_i32_0 : i32, i32
  }
  func.func @transform_5(%arg0: i32) -> (i32, i32) {
    %c0_i32 = arith.constant 0 : i32
    %c0_i32_0 = arith.constant 0 : i32
    return %arg0, %c0_i32 : i32, i32
  }
}

</mosaic_0001>

<llo_original>
// kernel: ppo_forward.1
$region0: #{ppo_forward.1}
  #allocation0 [shape = 'u32[]', space=smem, size = 0x4, offset = 0x4, fixed_abs, tag = 'smem constant byte address 0x4 - core index']
  #allocation1 [shape = 'u32[72,128]{1,0:T(1,128)}', space=vmem, size = 0x9000, scoped, tag = 'internal scratch']
  %s0 = inlined_call_operand.vmem [shape: f32[8,32], index: 0, kind: input, shape index: {}]
  %s1 = inlined_call_operand.vmem [shape: bf16[32,256], index: 1, kind: input, shape index: {}]
  %s2 = inlined_call_operand.vmem [shape: bf16[256,256], index: 2, kind: input, shape index: {}]
  %s3 = inlined_call_operand.vmem [shape: bf16[256,128], index: 3, kind: input, shape index: {}]
  %s4 = inlined_call_operand.vmem [shape: f32[8,256], index: 4, kind: input, shape index: {}]
  %s5 = inlined_call_operand.vmem [shape: f32[8,128], index: 5, kind: output, shape index: {}]
  %s6 = sld [smem:[#allocation0]]
  $region30: #{ppo_forward.1} parent=0
    _
  %s8 = ssub.s32 1, %s6
  %s9 = scalar_select 0, %s8, %s6
  // Predicated region
  $region2: #{ppo_forward.1} parent=0 // pred_check
    _
  $region3: #{ppo_forward.1} parent=0 // pred_check_branch
    %11 = sbr.rel (0) target = $region5
  $region4: #{ppo_forward.1} parent=0 // pred_region
    _
  $region5: #{ppo_forward.1} parent=0 // pred_fallthru
    _
  // Predicated region
  $region6: #{ppo_forward.1} parent=0 // pred_check
    _
  $region7: #{ppo_forward.1} parent=0 // pred_check_branch
    %13 = sbr.rel (0) target = $region9
  $region8: #{ppo_forward.1} parent=0 // pred_region
    _
  $region9: #{ppo_forward.1} parent=0 // pred_fallthru
    _
  // Predicated region
  $region10: #{ppo_forward.1} parent=0 // pred_check
    _
  $region11: #{ppo_forward.1} parent=0 // pred_check_branch
    %15 = sbr.rel (0) target = $region13
  $region12: #{ppo_forward.1} parent=0 // pred_region
    _
  $region13: #{ppo_forward.1} parent=0 // pred_fallthru
    _
  // Predicated region
  $region14: #{ppo_forward.1} parent=0 // pred_check
    _
  $region15: #{ppo_forward.1} parent=0 // pred_check_branch
    %17 = sbr.rel (0) target = $region17
  $region16: #{ppo_forward.1} parent=0 // pred_region
    _
  $region17: #{ppo_forward.1} parent=0 // pred_fallthru
    _
  // Predicated region
  $region18: #{ppo_forward.1} parent=0 // pred_check
    _
  $region19: #{ppo_forward.1} parent=0 // pred_check_branch
    %19 = sbr.rel (0) target = $region21
  $region20: #{ppo_forward.1} parent=0 // pred_region
    _
  $region21: #{ppo_forward.1} parent=0 // pred_fallthru
    _
  %v21 = vld [vmem:[%s0] sm:$0xff]
  %v22 = vld [vmem:[%s4] sm:$0xff]
  %v23 = vld [vmem:[%s4 + $0x8] sm:$0xff]
  %v24 = vpack.c.bf16 %v21, %v21
  %v25 = vld [vmem:[%s1] sm:$0xff]
  %v26 = vld [vmem:[%s1 + $0x8] sm:$0xff]
  %v27 = vld [vmem:[%s1 + $0x10] sm:$0xff]
  %v28 = vld [vmem:[%s1 + $0x18] sm:$0xff]
  %v29 = vperm.slane %v22, 0
  %v30 = vperm.slane %v23, 0
  %v35 = vunpack.c.l.b16 %v25
  %v36 = vunpack.c.h.b16 %v25
  %v37 = vunpack.c.l.b16 %v26
  %v38 = vunpack.c.h.b16 %v26
  %v39 = vunpack.c.l.b16 %v27
  %v40 = vunpack.c.h.b16 %v27
  %v41 = vunpack.c.l.b16 %v28
  %v42 = vunpack.c.h.b16 %v28
  %v43 = vpack.c.b16 %v37, %v35
  %v44 = vpack.c.b16 %v38, %v36
  %v45 = vpack.c.b16 %v41, %v39
  %v46 = vpack.c.b16 %v42, %v40
  %vm51 = vcmask 261120
  %v53 = vsel %vm51, %v24, 0
  %55 = vmatpush.bf16.msra.mxu0 0
  %56 = vmatpush.bf16.msra.mxu0 0
  %57 = vmatpush.bf16.msra.mxu0 0
  %58 = vmatpush.bf16.msra.mxu0 0
  %59 = vmatpush.bf16.msra.mxu0 0
  %60 = vmatpush.bf16.msra.mxu0 0
  %61 = vmatpush.bf16.msra.mxu0 %v45
  %62 = vmatpush.bf16.msra.mxu0 %v43
  %63 = vmatmul.bf16.gmra.mxu0 %v53
  %v64 = vpop.f32.mrf.mxu0
  %v65 = vadd.f32 %v29, %v64
  %v66 = vpop.f32.mrf.mxu0
  %67 = vdwg.mxu0
  %68 = vmatpush.bf16.msra.mxu0 0
  %69 = vmatpush.bf16.msra.mxu0 0
  %70 = vmatpush.bf16.msra.mxu0 0
  %71 = vmatpush.bf16.msra.mxu0 0
  %72 = vmatpush.bf16.msra.mxu0 0
  %73 = vmatpush.bf16.msra.mxu0 0
  %74 = vmatpush.bf16.msra.mxu0 %v46
  %75 = vmatpush.bf16.msra.mxu0 %v44
  %76 = vmatmul.bf16.gmra.mxu0 %v53
  %v77 = vpop.f32.mrf.mxu0
  %v78 = vadd.f32 %v30, %v77
  %v79 = vpop.f32.mrf.mxu0
  %80 = vdwg.mxu0
  %v81 = vmax.f32 %v65, 0.0
  %v82 = vmax.f32 %v78, 0.0
  %v83 = vpack.c.bf16 %v81, %v81
  %v84 = vpack.c.bf16 %v82, %v82
  %v85 = vld [vmem:[%s2] sm:$0xff]
  %v86 = vld [vmem:[%s2 + $0x8] sm:$0xff]
  %v87 = vld [vmem:[%s2 + $0x10] sm:$0xff]
  %v88 = vld [vmem:[%s2 + $0x18] sm:$0xff]
  %v89 = vld [vmem:[%s2 + $0x20] sm:$0xff]
  %v90 = vld [vmem:[%s2 + $0x28] sm:$0xff]
  %v91 = vld [vmem:[%s2 + $0x30] sm:$0xff]
  %v92 = vld [vmem:[%s2 + $0x38] sm:$0xff]
  %v93 = vld [vmem:[%s2 + $0x40] sm:$0xff]
  %v94 = vld [vmem:[%s2 + $0x48] sm:$0xff]
  %v95 = vld [vmem:[%s2 + $0x50] sm:$0xff]
  %v96 = vld [vmem:[%s2 + $0x58] sm:$0xff]
  %v97 = vld [vmem:[%s2 + $0x60] sm:$0xff]
  %v98 = vld [vmem:[%s2 + $0x68] sm:$0xff]
  %v99 = vld [vmem:[%s2 + $0x70] sm:$0xff]
  %v100 = vld [vmem:[%s2 + $0x78] sm:$0xff]
  %v101 = vld [vmem:[%s2 + $0x80] sm:$0xff]
  %v102 = vld [vmem:[%s2 + $0x88] sm:$0xff]
  %v103 = vld [vmem:[%s2 + $0x90] sm:$0xff]
  %v104 = vld [vmem:[%s2 + $0x98] sm:$0xff]
  %v105 = vld [vmem:[%s2 + $0xa0] sm:$0xff]
  %v106 = vld [vmem:[%s2 + $0xa8] sm:$0xff]
  %v107 = vld [vmem:[%s2 + $0xb0] sm:$0xff]
  %v108 = vld [vmem:[%s2 + $0xb8] sm:$0xff]
  %v109 = vld [vmem:[%s2 + $0xc0] sm:$0xff]
  %v110 = vld [vmem:[%s2 + $0xc8] sm:$0xff]
  %v111 = vld [vmem:[%s2 + $0xd0] sm:$0xff]
  %v112 = vld [vmem:[%s2 + $0xd8] sm:$0xff]
  %v113 = vld [vmem:[%s2 + $0xe0] sm:$0xff]
  %v114 = vld [vmem:[%s2 + $0xe8] sm:$0xff]
  %v115 = vld [vmem:[%s2 + $0xf0] sm:$0xff]
  %v116 = vld [vmem:[%s2 + $0xf8] sm:$0xff]
  %v117 = vperm.slane %v22, 1
  %v118 = vperm.slane %v23, 1
  %v151 = vunpack.c.l.b16 %v85
  %v152 = vunpack.c.h.b16 %v85
  %v153 = vunpack.c.l.b16 %v86
  %v154 = vunpack.c.h.b16 %v86
  %v155 = vunpack.c.l.b16 %v87
  %v156 = vunpack.c.h.b16 %v87
  %v157 = vunpack.c.l.b16 %v88
  %v158 = vunpack.c.h.b16 %v88
  %v159 = vunpack.c.l.b16 %v89
  %v160 = vunpack.c.h.b16 %v89
  %v161 = vunpack.c.l.b16 %v90
  %v162 = vunpack.c.h.b16 %v90
  %v163 = vunpack.c.l.b16 %v91
  %v164 = vunpack.c.h.b16 %v91
  %v165 = vunpack.c.l.b16 %v92
  %v166 = vunpack.c.h.b16 %v92
  %v167 = vunpack.c.l.b16 %v93
  %v168 = vunpack.c.h.b16 %v93
  %v169 = vunpack.c.l.b16 %v94
  %v170 = vunpack.c.h.b16 %v94
  %v171 = vunpack.c.l.b16 %v95
  %v172 = vunpack.c.h.b16 %v95
  %v173 = vunpack.c.l.b16 %v96
  %v174 = vunpack.c.h.b16 %v96
  %v175 = vunpack.c.l.b16 %v97
  %v176 = vunpack.c.h.b16 %v97
  %v177 = vunpack.c.l.b16 %v98
  %v178 = vunpack.c.h.b16 %v98
  %v179 = vunpack.c.l.b16 %v99
  %v180 = vunpack.c.h.b16 %v99
  %v181 = vunpack.c.l.b16 %v100
  %v182 = vunpack.c.h.b16 %v100
  %v183 = vunpack.c.l.b16 %v101
  %v184 = vunpack.c.h.b16 %v101
  %v185 = vunpack.c.l.b16 %v102
  %v186 = vunpack.c.h.b16 %v102
  %v187 = vunpack.c.l.b16 %v103
  %v188 = vunpack.c.h.b16 %v103
  %v189 = vunpack.c.l.b16 %v104
  %v190 = vunpack.c.h.b16 %v104
  %v191 = vunpack.c.l.b16 %v105
  %v192 = vunpack.c.h.b16 %v105
  %v193 = vunpack.c.l.b16 %v106
  %v194 = vunpack.c.h.b16 %v106
  %v195 = vunpack.c.l.b16 %v107
  %v196 = vunpack.c.h.b16 %v107
  %v197 = vunpack.c.l.b16 %v108
  %v198 = vunpack.c.h.b16 %v108
  %v199 = vunpack.c.l.b16 %v109
  %v200 = vunpack.c.h.b16 %v109
  %v201 = vunpack.c.l.b16 %v110
  %v202 = vunpack.c.h.b16 %v110
  %v203 = vunpack.c.l.b16 %v111
  %v204 = vunpack.c.h.b16 %v111
  %v205 = vunpack.c.l.b16 %v112
  %v206 = vunpack.c.h.b16 %v112
  %v207 = vunpack.c.l.b16 %v113
  %v208 = vunpack.c.h.b16 %v113
  %v209 = vunpack.c.l.b16 %v114
  %v210 = vunpack.c.h.b16 %v114
  %v211 = vunpack.c.l.b16 %v115
  %v212 = vunpack.c.h.b16 %v115
  %v213 = vunpack.c.l.b16 %v116
  %v214 = vunpack.c.h.b16 %v116
  %v215 = vpack.c.b16 %v153, %v151
  %v216 = vpack.c.b16 %v154, %v152
  %v217 = vpack.c.b16 %v157, %v155
  %v218 = vpack.c.b16 %v158, %v156
  %v219 = vpack.c.b16 %v161, %v159
  %v220 = vpack.c.b16 %v162, %v160
  %v221 = vpack.c.b16 %v165, %v163
  %v222 = vpack.c.b16 %v166, %v164
  %v223 = vpack.c.b16 %v169, %v167
  %v224 = vpack.c.b16 %v170, %v168
  %v225 = vpack.c.b16 %v173, %v171
  %v226 = vpack.c.b16 %v174, %v172
  %v227 = vpack.c.b16 %v177, %v175
  %v228 = vpack.c.b16 %v178, %v176
  %v229 = vpack.c.b16 %v181, %v179
  %v230 = vpack.c.b16 %v182, %v180
  %v231 = vpack.c.b16 %v185, %v183
  %v232 = vpack.c.b16 %v186, %v184
  %v233 = vpack.c.b16 %v189, %v187
  %v234 = vpack.c.b16 %v190, %v188
  %v235 = vpack.c.b16 %v193, %v191
  %v236 = vpack.c.b16 %v194, %v192
  %v237 = vpack.c.b16 %v197, %v195
  %v238 = vpack.c.b16 %v198, %v196
  %v239 = vpack.c.b16 %v201, %v199
  %v240 = vpack.c.b16 %v202, %v200
  %v241 = vpack.c.b16 %v205, %v203
  %v242 = vpack.c.b16 %v206, %v204
  %v243 = vpack.c.b16 %v209, %v207
  %v244 = vpack.c.b16 %v210, %v208
  %v245 = vpack.c.b16 %v213, %v211
  %v246 = vpack.c.b16 %v214, %v212
  %279 = vmatpush.bf16.msra.mxu0 %v229
  %280 = vmatpush.bf16.msra.mxu0 %v227
  %281 = vmatpush.bf16.msra.mxu0 %v225
  %282 = vmatpush.bf16.msra.mxu0 %v223
  %283 = vmatpush.bf16.msra.mxu0 %v221
  %284 = vmatpush.bf16.msra.mxu0 %v219
  %285 = vmatpush.bf16.msra.mxu0 %v217
  %286 = vmatpush.bf16.msra.mxu0 %v215
  %287 = vmatmul.bf16.gmra.mxu0 %v83
  %v288 = vpop.f32.mrf.mxu0
  %v289 = vadd.f32 %v117, %v288
  %v290 = vpop.f32.mrf.mxu0
  %291 = vdwg.mxu0
  %292 = vmatpush.bf16.msra.mxu0 %v245
  %293 = vmatpush.bf16.msra.mxu0 %v243
  %294 = vmatpush.bf16.msra.mxu0 %v241
  %295 = vmatpush.bf16.msra.mxu0 %v239
  %296 = vmatpush.bf16.msra.mxu0 %v237
  %297 = vmatpush.bf16.msra.mxu0 %v235
  %298 = vmatpush.bf16.msra.mxu0 %v233
  %299 = vmatpush.bf16.msra.mxu0 %v231
  %300 = vmatmul.bf16.gmra.mxu0 %v84
  %v301 = vpop.f32.mrf.mxu0
  %v302 = vadd.f32 %v289, %v301
  %v303 = vpop.f32.mrf.mxu0
  %304 = vdwg.mxu0
  %305 = vmatpush.bf16.msra.mxu0 %v230
  %306 = vmatpush.bf16.msra.mxu0 %v228
  %307 = vmatpush.bf16.msra.mxu0 %v226
  %308 = vmatpush.bf16.msra.mxu0 %v224
  %309 = vmatpush.bf16.msra.mxu0 %v222
  %310 = vmatpush.bf16.msra.mxu0 %v220
  %311 = vmatpush.bf16.msra.mxu0 %v218
  %312 = vmatpush.bf16.msra.mxu0 %v216
  %313 = vmatmul.bf16.gmra.mxu0 %v83
  %v314 = vpop.f32.mrf.mxu0
  %v315 = vadd.f32 %v118, %v314
  %v316 = vpop.f32.mrf.mxu0
  %317 = vdwg.mxu0
  %318 = vmatpush.bf16.msra.mxu0 %v246
  %319 = vmatpush.bf16.msra.mxu0 %v244
  %320 = vmatpush.bf16.msra.mxu0 %v242
  %321 = vmatpush.bf16.msra.mxu0 %v240
  %322 = vmatpush.bf16.msra.mxu0 %v238
  %323 = vmatpush.bf16.msra.mxu0 %v236
  %324 = vmatpush.bf16.msra.mxu0 %v234
  %325 = vmatpush.bf16.msra.mxu0 %v232
  %326 = vmatmul.bf16.gmra.mxu0 %v84
  %v327 = vpop.f32.mrf.mxu0
  %v328 = vadd.f32 %v315, %v327
  %v329 = vpop.f32.mrf.mxu0
  %330 = vdwg.mxu0
  %v331 = vmax.f32 %v302, 0.0
  %v332 = vmax.f32 %v328, 0.0
  %v333 = vpack.c.bf16 %v331, %v331
  %v334 = vpack.c.bf16 %v332, %v332
  %v335 = vld [vmem:[%s3] sm:$0xf]
  %v336 = vld [vmem:[%s3 + $0x4] sm:$0xf]
  %v337 = vld [vmem:[%s3 + $0x8] sm:$0xf]
  %v338 = vld [vmem:[%s3 + $0xc] sm:$0xf]
  %v339 = vld [vmem:[%s3 + $0x10] sm:$0xf]
  %v340 = vld [vmem:[%s3 + $0x14] sm:$0xf]
  %v341 = vld [vmem:[%s3 + $0x18] sm:$0xf]
  %v342 = vld [vmem:[%s3 + $0x1c] sm:$0xf]
  %v343 = vld [vmem:[%s3 + $0x20] sm:$0xf]
  %v344 = vld [vmem:[%s3 + $0x24] sm:$0xf]
  %v345 = vld [vmem:[%s3 + $0x28] sm:$0xf]
  %v346 = vld [vmem:[%s3 + $0x2c] sm:$0xf]
  %v347 = vld [vmem:[%s3 + $0x30] sm:$0xf]
  %v348 = vld [vmem:[%s3 + $0x34] sm:$0xf]
  %v349 = vld [vmem:[%s3 + $0x38] sm:$0xf]
  %v350 = vld [vmem:[%s3 + $0x3c] sm:$0xf]
  %v351 = vld [vmem:[%s3 + $0x40] sm:$0xf]
  %v352 = vld [vmem:[%s3 + $0x44] sm:$0xf]
  %v353 = vld [vmem:[%s3 + $0x48] sm:$0xf]
  %v354 = vld [vmem:[%s3 + $0x4c] sm:$0xf]
  %v355 = vld [vmem:[%s3 + $0x50] sm:$0xf]
  %v356 = vld [vmem:[%s3 + $0x54] sm:$0xf]
  %v357 = vld [vmem:[%s3 + $0x58] sm:$0xf]
  %v358 = vld [vmem:[%s3 + $0x5c] sm:$0xf]
  %v359 = vld [vmem:[%s3 + $0x60] sm:$0xf]
  %v360 = vld [vmem:[%s3 + $0x64] sm:$0xf]
  %v361 = vld [vmem:[%s3 + $0x68] sm:$0xf]
  %v362 = vld [vmem:[%s3 + $0x6c] sm:$0xf]
  %v363 = vld [vmem:[%s3 + $0x70] sm:$0xf]
  %v364 = vld [vmem:[%s3 + $0x74] sm:$0xf]
  %v365 = vld [vmem:[%s3 + $0x78] sm:$0xf]
  %v366 = vld [vmem:[%s3 + $0x7c] sm:$0xf]
  %v367 = vperm.slane %v22, 2
  %v400 = vunpack.c.l.b16 %v335
  %v401 = vunpack.c.l.b16 %v336
  %v402 = vunpack.c.l.b16 %v337
  %v403 = vunpack.c.l.b16 %v338
  %v404 = vunpack.c.l.b16 %v339
  %v405 = vunpack.c.l.b16 %v340
  %v406 = vunpack.c.l.b16 %v341
  %v407 = vunpack.c.l.b16 %v342
  %v408 = vunpack.c.l.b16 %v343
  %v409 = vunpack.c.l.b16 %v344
  %v410 = vunpack.c.l.b16 %v345
  %v411 = vunpack.c.l.b16 %v346
  %v412 = vunpack.c.l.b16 %v347
  %v413 = vunpack.c.l.b16 %v348
  %v414 = vunpack.c.l.b16 %v349
  %v415 = vunpack.c.l.b16 %v350
  %v416 = vunpack.c.l.b16 %v351
  %v417 = vunpack.c.l.b16 %v352
  %v418 = vunpack.c.l.b16 %v353
  %v419 = vunpack.c.l.b16 %v354
  %v420 = vunpack.c.l.b16 %v355
  %v421 = vunpack.c.l.b16 %v356
  %v422 = vunpack.c.l.b16 %v357
  %v423 = vunpack.c.l.b16 %v358
  %v424 = vunpack.c.l.b16 %v359
  %v425 = vunpack.c.l.b16 %v360
  %v426 = vunpack.c.l.b16 %v361
  %v427 = vunpack.c.l.b16 %v362
  %v428 = vunpack.c.l.b16 %v363
  %v429 = vunpack.c.l.b16 %v364
  %v430 = vunpack.c.l.b16 %v365
  %v431 = vunpack.c.l.b16 %v366
  %v432 = vpack.c.b16 %v401, %v400
  %v433 = vpack.c.b16 %v403, %v402
  %v434 = vpack.c.b16 %v405, %v404
  %v435 = vpack.c.b16 %v407, %v406
  %v436 = vpack.c.b16 %v409, %v408
  %v437 = vpack.c.b16 %v411, %v410
  %v438 = vpack.c.b16 %v413, %v412
  %v439 = vpack.c.b16 %v415, %v414
  %v440 = vpack.c.b16 %v417, %v416
  %v441 = vpack.c.b16 %v419, %v418
  %v442 = vpack.c.b16 %v421, %v420
  %v443 = vpack.c.b16 %v423, %v422
  %v444 = vpack.c.b16 %v425, %v424
  %v445 = vpack.c.b16 %v427, %v426
  %v446 = vpack.c.b16 %v429, %v428
  %v447 = vpack.c.b16 %v431, %v430
  %464 = vmatpush.bf16.msra.mxu0 %v439
  %465 = vmatpush.bf16.msra.mxu0 %v438
  %466 = vmatpush.bf16.msra.mxu0 %v437
  %467 = vmatpush.bf16.msra.mxu0 %v436
  %468 = vmatpush.bf16.msra.mxu0 %v435
  %469 = vmatpush.bf16.msra.mxu0 %v434
  %470 = vmatpush.bf16.msra.mxu0 %v433
  %471 = vmatpush.bf16.msra.mxu0 %v432
  %472 = vmatmul.bf16.gmra.mxu0 %v333
  %v473 = vpop.f32.mrf.mxu0
  %v474 = vadd.f32 %v367, %v473
  %v475 = vpop.f32.mrf.mxu0
  %476 = vdwg.mxu0
  %477 = vmatpush.bf16.msra.mxu0 %v447
  %478 = vmatpush.bf16.msra.mxu0 %v446
  %479 = vmatpush.bf16.msra.mxu0 %v445
  %480 = vmatpush.bf16.msra.mxu0 %v444
  %481 = vmatpush.bf16.msra.mxu0 %v443
  %482 = vmatpush.bf16.msra.mxu0 %v442
  %483 = vmatpush.bf16.msra.mxu0 %v441
  %484 = vmatpush.bf16.msra.mxu0 %v440
  %485 = vmatmul.bf16.gmra.mxu0 %v334
  %v486 = vpop.f32.mrf.mxu0
  %v487 = vadd.f32 %v474, %v486
  %v488 = vpop.f32.mrf.mxu0
  %489 = vdwg.mxu0
  %490 = vst [vmem:[%s5] sm:$0xff] %v487
  // Predicated region
  $region22: #{ppo_forward.1} parent=0 // pred_check
    _
  $region23: #{ppo_forward.1} parent=0 // pred_check_branch
    %492 = sbr.rel (0) target = $region25
  $region24: #{ppo_forward.1} parent=0 // pred_region
    _
  $region25: #{ppo_forward.1} parent=0 // pred_fallthru
    _
  // Predicated region
  $region26: #{ppo_forward.1} parent=0 // pred_check
    _
  $region27: #{ppo_forward.1} parent=0 // pred_check_branch
    %494 = sbr.rel (0) target = $region29
  $region28: #{ppo_forward.1} parent=0 // pred_region
    _
  $region29: #{ppo_forward.1} parent=0 // pred_fallthru
    _

</llo_original>
